<compile_context>
chip_gen: v7x
topology: tpu7x:2x2x1
jax: 0.10.0
libtpu: 0.0.40
codegen_flags: <defaults>
</compile_context>

<pallas_src>
import functools

import jax
import jax.numpy as jnp
from jax.experimental import pallas as pl
from jax.experimental.pallas import tpu as pltpu

BN_EPS = 1e-5
LEAKY_SLOPE = 0.1
LANE = 128


def _round_up(x, m):
    return (x + m - 1) // m * m


# ---------------------------------------------------------------------------
# Pass 1: conv (matmul) + per-tile BN partial statistics.
# ---------------------------------------------------------------------------
def conv_stats_kernel(patches_ref, w_ref, y_ref, psum_ref, psumsq_ref):
    # patches_ref: [TILE_M, K_pad] (bf16)   w_ref: [K_pad, C_pad] (bf16)
    # y_ref:       [TILE_M, C_pad] f32
    # psum_ref / psumsq_ref: [1, 8, C_pad] f32 (per-tile partials, sublane-replicated)
    y = jnp.dot(patches_ref[...], w_ref[...], preferred_element_type=jnp.float32)
    y_ref[...] = y

    c = y.shape[-1]
    s = jnp.sum(y, axis=0)          # [C_pad]
    sq = jnp.sum(y * y, axis=0)     # [C_pad]  (one-pass var form: E[y^2] - E[y]^2)
    psum_ref[...] = jnp.broadcast_to(s[None, None, :], (1, 8, c))
    psumsq_ref[...] = jnp.broadcast_to(sq[None, None, :], (1, 8, c))


# ---------------------------------------------------------------------------
# Pass 2: folded BN (y * scale + bias) + LeakyReLU(0.1).
# ---------------------------------------------------------------------------
def bn_act_kernel(y_ref, scale_ref, bias_ref, o_ref):
    yn = y_ref[...] * scale_ref[...] + bias_ref[...]          # single FMA per element
    o_ref[...] = jnp.where(yn >= 0.0, yn, LEAKY_SLOPE * yn).astype(o_ref.dtype)


def _im2col_nhwc(x_nhwc, kh, kw, stride, padding):
    """Im2col with patch axis ordered as (ky, kx, cin)."""
    n, h, w, c = x_nhwc.shape
    if padding > 0:
        x_nhwc = jnp.pad(
            x_nhwc, ((0, 0), (padding, padding), (padding, padding), (0, 0))
        )
        h, w = h + 2 * padding, w + 2 * padding
    oh = (h - kh) // stride + 1
    ow = (w - kw) // stride + 1
    cols = []
    for ky in range(kh):
        for kx in range(kw):
            sl = x_nhwc[:, ky:ky + (oh - 1) * stride + 1:stride,
                        kx:kx + (ow - 1) * stride + 1:stride, :]
            cols.append(sl)  # [N, OH, OW, C]
    patches = jnp.concatenate(cols, axis=-1)  # [N, OH, OW, KH*KW*C]
    return patches.reshape(n * oh * ow, kh * kw * c), oh, ow


@functools.partial(
    jax.jit,
    static_argnames=("kernel_size", "stride", "padding", "tile_m", "matmul_dtype"),
)
def conv_bn_leaky(x_nchw, weight, gamma, beta, *, kernel_size=3, stride=1,
                  padding=0, tile_m=512, matmul_dtype=jnp.bfloat16):
    """x_nchw: [N, Cin, H, W], weight: [Cout, Cin, KH, KW] (PyTorch layouts)."""
    n, cin, h, w = x_nchw.shape
    cout, _, kh, kw = weight.shape
    out_dtype = x_nchw.dtype

    # -------- glue: layout conversion + im2col (bf16) + padding to lane-dense --------
    x_nhwc = jnp.transpose(x_nchw, (0, 2, 3, 1)).astype(matmul_dtype)
    patches, oh, ow = _im2col_nhwc(x_nhwc, kh, kw, stride, padding)       # [M, K]
    m_true, k = patches.shape

    k_pad = _round_up(k, LANE)
    c_pad = _round_up(cout, LANE)
    m_pad = _round_up(m_true, tile_m)
    num_tiles = m_pad // tile_m

    patches_p = jnp.pad(patches, ((0, m_pad - m_true), (0, k_pad - k)))   # bf16, zeros
    w_mat = jnp.transpose(weight, (2, 3, 1, 0)).reshape(k, cout)
    w_p = jnp.pad(w_mat, ((0, k_pad - k), (0, c_pad - cout))).astype(matmul_dtype)
    gamma_p = jnp.pad(gamma.astype(jnp.float32), (0, c_pad - cout))
    beta_p = jnp.pad(beta.astype(jnp.float32), (0, c_pad - cout))

    itemsize = jnp.dtype(matmul_dtype).itemsize
    compiler_params = pltpu.CompilerParams(
        dimension_semantics=("parallel",),
        vmem_limit_bytes=32 * 1024 * 1024,
    )

    # -------- pass 1: conv + per-tile BN partial sums --------
    y_f32, psum, psumsq = pl.pallas_call(
        conv_stats_kernel,
        out_shape=(
            jax.ShapeDtypeStruct((m_pad, c_pad), jnp.float32),
            jax.ShapeDtypeStruct((num_tiles, 8, c_pad), jnp.float32),
            jax.ShapeDtypeStruct((num_tiles, 8, c_pad), jnp.float32),
        ),
        grid=(num_tiles,),
        in_specs=[
            pl.BlockSpec((tile_m, k_pad), lambda i: (i, 0)),
            pl.BlockSpec((k_pad, c_pad), lambda i: (0, 0)),
        ],
        out_specs=(
            pl.BlockSpec((tile_m, c_pad), lambda i: (i, 0)),
            pl.BlockSpec((1, 8, c_pad), lambda i: (i, 0, 0)),
            pl.BlockSpec((1, 8, c_pad), lambda i: (i, 0, 0)),
        ),
        compiler_params=compiler_params,
        cost_estimate=pl.CostEstimate(
            flops=2 * m_pad * k_pad * c_pad,
            transcendentals=0,
            bytes_accessed=(m_pad * k_pad * itemsize
                            + k_pad * c_pad * itemsize
                            + m_pad * c_pad * 4
                            + 2 * num_tiles * 8 * c_pad * 4),
        ),
    )(patches_p, w_p)

    # -------- glue: reduce partials, fold BN into per-channel scale / bias --------
    total_sum = jnp.sum(psum[:, 0, :], axis=0)       # [C_pad]
    total_sq = jnp.sum(psumsq[:, 0, :], axis=0)      # [C_pad]
    inv_m = 1.0 / float(m_true)                      # true M (padded rows are zero)
    mean = total_sum * inv_m
    var = jnp.maximum(total_sq * inv_m - mean * mean, 0.0)   # biased, as in BN forward
    inv_std = jax.lax.rsqrt(var + BN_EPS)
    scale = (gamma_p * inv_std).reshape(1, c_pad)
    bias = (beta_p - mean * gamma_p * inv_std).reshape(1, c_pad)

    # -------- pass 2: normalize + LeakyReLU --------
    out_flat = pl.pallas_call(
        bn_act_kernel,
        out_shape=jax.ShapeDtypeStruct((m_pad, c_pad), out_dtype),
        grid=(num_tiles,),
        in_specs=[
            pl.BlockSpec((tile_m, c_pad), lambda i: (i, 0)),
            pl.BlockSpec((1, c_pad), lambda i: (0, 0)),
            pl.BlockSpec((1, c_pad), lambda i: (0, 0)),
        ],
        out_specs=pl.BlockSpec((tile_m, c_pad), lambda i: (i, 0)),
        compiler_params=compiler_params,
        cost_estimate=pl.CostEstimate(
            flops=4 * m_pad * c_pad,
            transcendentals=0,
            bytes_accessed=(m_pad * c_pad * 4
                            + m_pad * c_pad * jnp.dtype(out_dtype).itemsize
                            + 2 * c_pad * 4),
        ),
    )(y_f32, scale, bias)

    # -------- glue: strip padding, back to NCHW --------
    out = out_flat[:m_true, :cout].reshape(n, oh, ow, cout)
    return jnp.transpose(out, (0, 3, 1, 2))


if __name__ == "__main__":
    key = jax.random.PRNGKey(0)
    k_x, k_w = jax.random.split(key)

    # ConvBN(ch_in=4, ch_out=8, kernel_size=3, stride=1, padding=0) on [2, 4, 16, 16].
    ch_in, ch_out, ksize, stride, padding = 4, 8, 3, 1, 0
    x = jax.random.normal(k_x, (2, ch_in, 16, 16), dtype=jnp.float32)

    weight = 0.1 * jax.random.normal(
        k_w, (ch_out, ch_in, ksize, ksize), dtype=jnp.float32
    )
    gamma = jnp.ones((ch_out,), dtype=jnp.float32)   # PyTorch BN defaults
    beta = jnp.zeros((ch_out,), dtype=jnp.float32)

    out = conv_bn_leaky(
        x, weight, gamma, beta,
        kernel_size=ksize, stride=stride, padding=padding,
        tile_m=128,  # M = 2*14*14 = 392 -> padded to 512 -> 4 grid tiles
    )
    jax.block_until_ready(out)
    assert out.shape == (2, ch_out, 14, 14), out.shape
    assert bool(jnp.all(jnp.isfinite(out)))
    print("KERNEL_OK")
</pallas_src>

<mosaic_0001>
module attributes {stable_mosaic.version = 11 : i64} {
  func.func @conv_stats_kernel(%arg0: i32, %arg1: memref<128x128xbf16, #tpu.memory_space<vmem>>, %arg2: memref<128x128xbf16, #tpu.memory_space<vmem>>, %arg3: memref<128x128xf32, #tpu.memory_space<vmem>>, %arg4: memref<1x8x128xf32, #tpu.memory_space<vmem>>, %arg5: memref<1x8x128xf32, #tpu.memory_space<vmem>>) attributes {dimension_semantics = [#tpu.dimension_semantics<parallel>], iteration_bounds = array<i64: 4>, scalar_prefetch = 0 : i64, scratch_operands = 0 : i64, tpu.core_type = #tpu.core_type<tc>, window_params = [{transform_indices = @transform_0, window_bounds = array<i64: 128, 128>}, {pipeline_mode = #tpu.pipeline_mode<synchronous>, transform_indices = @transform_1, window_bounds = array<i64: 128, 128>}, {transform_indices = @transform_2, window_bounds = array<i64: 128, 128>}, {transform_indices = @transform_3, window_bounds = array<i64: 1, 8, 128>}, {transform_indices = @transform_4, window_bounds = array<i64: 1, 8, 128>}]} {
    %c0 = arith.constant 0 : index
    %c0_0 = arith.constant 0 : index
    %0 = vector.load %arg1[%c0, %c0_0] : memref<128x128xbf16, #tpu.memory_space<vmem>>, vector<128x128xbf16>
    %c0_1 = arith.constant 0 : index
    %c0_2 = arith.constant 0 : index
    %1 = vector.load %arg2[%c0_1, %c0_2] : memref<128x128xbf16, #tpu.memory_space<vmem>>, vector<128x128xbf16>
    %cst = arith.constant dense<0.000000e+00> : vector<128x128xf32>
    %2 = tpu.matmul %0, %1, %cst {dimension_numbers = #tpu.dot_dimension_numbers<[1], [0], [0], [1], [0, 0, 1, 1], [], []>} : vector<128x128xbf16>, vector<128x128xbf16>, vector<128x128xf32> -> vector<128x128xf32>
    %c0_3 = arith.constant 0 : index
    %c0_4 = arith.constant 0 : index
    %3 = vector.load %arg3[%c0_3, %c0_4] : memref<128x128xf32, #tpu.memory_space<vmem>>, vector<128x128xf32>
    tpu.vector_store %arg3[%c0_3, %c0_4], %2 {strides = array<i32>} : memref<128x128xf32, #tpu.memory_space<vmem>>, vector<128x128xf32>,
    %cst_5 = arith.constant dense<0.000000e+00> : vector<128xf32>
    %4 = vector.multi_reduction <add>, %2, %cst_5 [0] : vector<128x128xf32> to vector<128xf32>
    %5 = arith.mulf %2, %2 : vector<128x128xf32>
    %cst_6 = arith.constant dense<0.000000e+00> : vector<128xf32>
    %6 = vector.multi_reduction <add>, %5, %cst_6 [0] : vector<128x128xf32> to vector<128xf32>
    %7 = vector.shape_cast %4 : vector<128xf32> to vector<1x1x128xf32>
    %8 = vector.shape_cast %7 : vector<1x1x128xf32> to vector<1x1x128xf32>
    %9 = vector.broadcast %8 : vector<1x1x128xf32> to vector<1x8x128xf32>
    %c0_7 = arith.constant 0 : index
    %c0_8 = arith.constant 0 : index
    %c0_9 = arith.constant 0 : index
    %10 = vector.load %arg4[%c0_7, %c0_8, %c0_9] : memref<1x8x128xf32, #tpu.memory_space<vmem>>, vector<1x8x128xf32>
    tpu.vector_store %arg4[%c0_7, %c0_8, %c0_9], %9 {strides = array<i32>} : memref<1x8x128xf32, #tpu.memory_space<vmem>>, vector<1x8x128xf32>,
    %11 = vector.shape_cast %6 : vector<128xf32> to vector<1x1x128xf32>
    %12 = vector.shape_cast %11 : vector<1x1x128xf32> to vector<1x1x128xf32>
    %13 = vector.broadcast %12 : vector<1x1x128xf32> to vector<1x8x128xf32>
    %c0_10 = arith.constant 0 : index
    %c0_11 = arith.constant 0 : index
    %c0_12 = arith.constant 0 : index
    %14 = vector.load %arg5[%c0_10, %c0_11, %c0_12] : memref<1x8x128xf32, #tpu.memory_space<vmem>>, vector<1x8x128xf32>
    tpu.vector_store %arg5[%c0_10, %c0_11, %c0_12], %13 {strides = array<i32>} : memref<1x8x128xf32, #tpu.memory_space<vmem>>, vector<1x8x128xf32>,
    return
  }
  func.func @transform_0(%arg0: i32) -> (i32, i32) {
    %c0_i32 = arith.constant 0 : i32
    %c0_i32_0 = arith.constant 0 : i32
    return %arg0, %c0_i32 : i32, i32
  }
  func.func @transform_1(%arg0: i32) -> (i32, i32) {
    %c0_i32 = arith.constant 0 : i32
    %c0_i32_0 = arith.constant 0 : i32
    %c0_i32_1 = arith.constant 0 : i32
    return %c0_i32, %c0_i32_0 : i32, i32
  }
  func.func @transform_2(%arg0: i32) -> (i32, i32) {
    %c0_i32 = arith.constant 0 : i32
    %c0_i32_0 = arith.constant 0 : i32
    return %arg0, %c0_i32 : i32, i32
  }
  func.func @transform_3(%arg0: i32) -> (i32, i32, i32) {
    %c0_i32 = arith.constant 0 : i32
    %c0_i32_0 = arith.constant 0 : i32
    %c0_i32_1 = arith.constant 0 : i32
    return %arg0, %c0_i32, %c0_i32_0 : i32, i32, i32
  }
  func.func @transform_4(%arg0: i32) -> (i32, i32, i32) {
    %c0_i32 = arith.constant 0 : i32
    %c0_i32_0 = arith.constant 0 : i32
    %c0_i32_1 = arith.constant 0 : i32
    return %arg0, %c0_i32, %c0_i32_0 : i32, i32, i32
  }
}

module attributes {stable_mosaic.version = 11 : i64} {
  func.func @bn_act_kernel(%arg0: i32, %arg1: memref<128x128xf32, #tpu.memory_space<vmem>>, %arg2: memref<1x128xf32, #tpu.memory_space<vmem>>, %arg3: memref<1x128xf32, #tpu.memory_space<vmem>>, %arg4: memref<128x128xf32, #tpu.memory_space<vmem>>) attributes {dimension_semantics = [#tpu.dimension_semantics<parallel>], iteration_bounds = array<i64: 4>, scalar_prefetch = 0 : i64, scratch_operands = 0 : i64, tpu.core_type = #tpu.core_type<tc>, window_params = [{transform_indices = @transform_0, window_bounds = array<i64: 128, 128>}, {pipeline_mode = #tpu.pipeline_mode<synchronous>, transform_indices = @transform_1, window_bounds = array<i64: 1, 128>}, {pipeline_mode = #tpu.pipeline_mode<synchronous>, transform_indices = @transform_2, window_bounds = array<i64: 1, 128>}, {transform_indices = @transform_3, window_bounds = array<i64: 128, 128>}]} {
    %c0 = arith.constant 0 : index
    %c0_0 = arith.constant 0 : index
    %0 = vector.load %arg1[%c0, %c0_0] : memref<128x128xf32, #tpu.memory_space<vmem>>, vector<128x128xf32>
    %c0_1 = arith.constant 0 : index
    %c0_2 = arith.constant 0 : index
    %1 = vector.load %arg2[%c0_1, %c0_2] : memref<1x128xf32, #tpu.memory_space<vmem>>, vector<1x128xf32>
    %2 = vector.broadcast %1 : vector<1x128xf32> to vector<128x128xf32>
    %3 = arith.mulf %0, %2 : vector<128x128xf32>
    %c0_3 = arith.constant 0 : index
    %c0_4 = arith.constant 0 : index
    %4 = vector.load %arg3[%c0_3, %c0_4] : memref<1x128xf32, #tpu.memory_space<vmem>>, vector<1x128xf32>
    %5 = vector.broadcast %4 : vector<1x128xf32> to vector<128x128xf32>
    %6 = arith.addf %3, %5 : vector<128x128xf32>
    %cst = arith.constant 0.000000e+00 : f32
    %7 = vector.broadcast %cst : f32 to vector<128x128xf32>
    %8 = arith.cmpf oge, %6, %7 : vector<128x128xf32>
    %cst_5 = arith.constant 1.000000e-01 : f32
    %9 = vector.broadcast %cst_5 : f32 to vector<128x128xf32>
    %10 = arith.mulf %9, %6 : vector<128x128xf32>
    %11 = arith.select %8, %6, %10 : vector<128x128xi1>, vector<128x128xf32>
    %c0_6 = arith.constant 0 : index
    %c0_7 = arith.constant 0 : index
    %12 = vector.load %arg4[%c0_6, %c0_7] : memref<128x128xf32, #tpu.memory_space<vmem>>, vector<128x128xf32>
    tpu.vector_store %arg4[%c0_6, %c0_7], %11 {strides = array<i32>} : memref<128x128xf32, #tpu.memory_space<vmem>>, vector<128x128xf32>,
    return
  }
  func.func @transform_0(%arg0: i32) -> (i32, i32) {
    %c0_i32 = arith.constant 0 : i32
    %c0_i32_0 = arith.constant 0 : i32
    return %arg0, %c0_i32 : i32, i32
  }
  func.func @transform_1(%arg0: i32) -> (i32, i32) {
    %c0_i32 = arith.constant 0 : i32
    %c0_i32_0 = arith.constant 0 : i32
    %c0_i32_1 = arith.constant 0 : i32
    return %c0_i32, %c0_i32_0 : i32, i32
  }
  func.func @transform_2(%arg0: i32) -> (i32, i32) {
    %c0_i32 = arith.constant 0 : i32
    %c0_i32_0 = arith.constant 0 : i32
    %c0_i32_1 = arith.constant 0 : i32
    return %c0_i32, %c0_i32_0 : i32, i32
  }
  func.func @transform_3(%arg0: i32) -> (i32, i32) {
    %c0_i32 = arith.constant 0 : i32
    %c0_i32_0 = arith.constant 0 : i32
    return %arg0, %c0_i32 : i32, i32
  }
}

</mosaic_0001>

<llo_original>
// kernel: conv_bn_leaky.2
$region0: #{conv_bn_leaky.2}
  #allocation0 [shape = 'u32[]', space=smem, size = 0x4, offset = 0x4, fixed_abs, tag = 'smem constant byte address 0x4 - core index']
  #allocation1 [shape = 'u32[144,128]{1,0:T(1,128)}', space=vmem, size = 0x12000, scoped, tag = 'internal scratch']
  %s0 = inlined_call_operand.vmem [shape: bf16[512,128], index: 0, kind: input, shape index: {}]
  %s1 = inlined_call_operand.vmem [shape: bf16[128,128], index: 1, kind: input, shape index: {}]
  %s2 = inlined_call_operand.vmem [shape: f32[512,128], index: 2, kind: output, shape index: {0}]
  %s3 = inlined_call_operand.vmem [shape: f32[4,8,128], index: 3, kind: output, shape index: {1}]
  %s4 = inlined_call_operand.vmem [shape: f32[4,8,128], index: 4, kind: output, shape index: {2}]
  %5 = xla_tuple %s2, %s3, %s4
  %s6 = sld [smem:[#allocation0]]
  $region57: #{conv_bn_leaky.2} parent=0
    _
  %s8 = ssub.s32 1, %s6
  %s9 = scalar_select 0, %s8, %s6
  loop: start=0, step=1, limit=6
  $region2: #{conv_bn_leaky.2} parent=0 // loop_pre_header
    _
  $region3: #{conv_bn_leaky.2} parent=0 // loop_header
    %s11 = sphi 0, %s15
    %p12 = scmp.ge.s32.totalorder %s11, 6
    %s21 = sphi 0, %s23
    %s24 = sphi 0, %s21
    %s25 = sphi 0, %s24
    %s41 = sphi 0, %s25
    %s45 = sphi 0, %s45
    %s47 = sphi 0, %s45
    %s48 = sphi 0, %s47
    %s62 = sphi 0, %s48
    %s68 = sphi 0, %s70
    %s71 = sphi 0, %s68
    %s72 = sphi 0, %s71
    %s88 = sphi 0, %s72
    %s94 = sphi 0, %s96
    %s97 = sphi 0, %s94
    %s98 = sphi 0, %s97
    %s114 = sphi 0, %s98
    %s120 = sphi 0, %s122
    %s123 = sphi 0, %s120
    %s124 = sphi 0, %s123
    %s140 = sphi 0, %s124
  $region4: #{conv_bn_leaky.2} parent=0 // loop_header_branch
    %14 = sbr.rel (%p12) target = $region8
  $region5: #{conv_bn_leaky.2} parent=0 // loop_body
    %s16 = ssub.s32 %s11, 1
    %s17 = ssub.s32 %s11, 2
    %s18 = sadd.s32 %s11, 1
    %s19 = ssub.s32 %s11, %s18
    %p20 = scmp.eq.s32.totalorder %s19, 0
    %s22 = sadd.s32 %s21, 1
    %s23 = scalar_select %p20, %s21, %s22
    %p26 = pneg %p20
    %p27 = scmp.eq.s32.totalorder %s11, 3
    %p28 = por %p26, %p27
    %p29 = scmp.ne.s32.totalorder %s21, %s24
    %p30 = scmp.eq.s32.totalorder %s11, 0
    %p31 = por %p29, %p30
    %p32 = scmp.ne.s32.totalorder %s21, %s24
    %p33 = scmp.eq.s32.totalorder %s16, 3
    %p34 = por %p32, %p33
    %p35 = scmp.ne.s32.totalorder %s24, %s25
    %p36 = scmp.eq.s32.totalorder %s16, 0
    %p37 = por %p35, %p36
    %p38 = scmp.ne.s32.totalorder %s24, %s25
    %p39 = scmp.eq.s32.totalorder %s17, 3
    %p40 = por %p38, %p39
    %p42 = scmp.ne.s32.totalorder %s25, %s41
    %p43 = scmp.eq.s32.totalorder %s17, 0
    %p44 = por %p42, %p43
    %s46 = sadd.s32 %s45, 1
    %p49 = scmp.eq.s32.totalorder %s11, 3
    %p50 = scmp.ne.s32.totalorder %s45, %s47
    %p51 = scmp.eq.s32.totalorder %s11, 0
    %p52 = por %p50, %p51
    %p53 = scmp.ne.s32.totalorder %s45, %s47
    %p54 = scmp.eq.s32.totalorder %s16, 3
    %p55 = por %p53, %p54
    %p56 = scmp.ne.s32.totalorder %s47, %s48
    %p57 = scmp.eq.s32.totalorder %s16, 0
    %p58 = por %p56, %p57
    %p59 = scmp.ne.s32.totalorder %s47, %s48
    %p60 = scmp.eq.s32.totalorder %s17, 3
    %p61 = por %p59, %p60
    %p63 = scmp.ne.s32.totalorder %s48, %s62
    %p64 = scmp.eq.s32.totalorder %s17, 0
    %p65 = por %p63, %p64
    %s66 = ssub.s32 %s11, %s18
    %p67 = scmp.eq.s32.totalorder %s66, 0
    %s69 = sadd.s32 %s68, 1
    %s70 = scalar_select %p67, %s68, %s69
    %p73 = pneg %p67
    %p74 = scmp.eq.s32.totalorder %s11, 3
    %p75 = por %p73, %p74
    %p76 = scmp.ne.s32.totalorder %s68, %s71
    %p77 = scmp.eq.s32.totalorder %s11, 0
    %p78 = por %p76, %p77
    %p79 = scmp.ne.s32.totalorder %s68, %s71
    %p80 = scmp.eq.s32.totalorder %s16, 3
    %p81 = por %p79, %p80
    %p82 = scmp.ne.s32.totalorder %s71, %s72
    %p83 = scmp.eq.s32.totalorder %s16, 0
    %p84 = por %p82, %p83
    %p85 = scmp.ne.s32.totalorder %s71, %s72
    %p86 = scmp.eq.s32.totalorder %s17, 3
    %p87 = por %p85, %p86
    %p89 = scmp.ne.s32.totalorder %s72, %s88
    %p90 = scmp.eq.s32.totalorder %s17, 0
    %p91 = por %p89, %p90
    %s92 = ssub.s32 %s11, %s18
    %p93 = scmp.eq.s32.totalorder %s92, 0
    %s95 = sadd.s32 %s94, 1
    %s96 = scalar_select %p93, %s94, %s95
    %p99 = pneg %p93
    %p100 = scmp.eq.s32.totalorder %s11, 3
    %p101 = por %p99, %p100
    %p102 = scmp.ne.s32.totalorder %s94, %s97
    %p103 = scmp.eq.s32.totalorder %s11, 0
    %p104 = por %p102, %p103
    %p105 = scmp.ne.s32.totalorder %s94, %s97
    %p106 = scmp.eq.s32.totalorder %s16, 3
    %p107 = por %p105, %p106
    %p108 = scmp.ne.s32.totalorder %s97, %s98
    %p109 = scmp.eq.s32.totalorder %s16, 0
    %p110 = por %p108, %p109
    %p111 = scmp.ne.s32.totalorder %s97, %s98
    %p112 = scmp.eq.s32.totalorder %s17, 3
    %p113 = por %p111, %p112
    %p115 = scmp.ne.s32.totalorder %s98, %s114
    %p116 = scmp.eq.s32.totalorder %s17, 0
    %p117 = por %p115, %p116
    %s118 = ssub.s32 %s11, %s18
    %p119 = scmp.eq.s32.totalorder %s118, 0
    %s121 = sadd.s32 %s120, 1
    %s122 = scalar_select %p119, %s120, %s121
    %p125 = pneg %p119
    %p126 = scmp.eq.s32.totalorder %s11, 3
    %p127 = por %p125, %p126
    %p128 = scmp.ne.s32.totalorder %s120, %s123
    %p129 = scmp.eq.s32.totalorder %s11, 0
    %p130 = por %p128, %p129
    %p131 = scmp.ne.s32.totalorder %s120, %s123
    %p132 = scmp.eq.s32.totalorder %s16, 3
    %p133 = por %p131, %p132
    %p134 = scmp.ne.s32.totalorder %s123, %s124
    %p135 = scmp.eq.s32.totalorder %s16, 0
    %p136 = por %p134, %p135
    %p137 = scmp.ne.s32.totalorder %s123, %s124
    %p138 = scmp.eq.s32.totalorder %s17, 3
    %p139 = por %p137, %p138
    %p141 = scmp.ne.s32.totalorder %s124, %s140
    %p142 = scmp.eq.s32.totalorder %s17, 0
    %p143 = por %p141, %p142
    %p144 = scmp.le.s32.totalorder 1, %s11
    %p145 = scmp.lt.s32.totalorder %s11, 5
    %p146 = pnand %p144, %p145
    %p147 = pneg %p146
    // Predicated region
    $region9: #{conv_bn_leaky.2} parent=5 // pred_check
      _
    $region10: #{conv_bn_leaky.2} parent=5 // pred_check_branch
      %149 = sbr.rel (%p146) target = $region12
    $region11: #{conv_bn_leaky.2} parent=5 // pred_region
      %s150 = ssub.s32 %s11, 1
      // Predicated region
      $region13: #{conv_bn_leaky.2} parent=11 // pred_check
        %p151 = pneg %p58
      $region14: #{conv_bn_leaky.2} parent=11 // pred_check_branch
        %153 = sbr.rel (%p151) target = $region16
      $region15: #{conv_bn_leaky.2} parent=11 // pred_region
        _
      $region16: #{conv_bn_leaky.2} parent=11 // pred_fallthru
        _
    $region12: #{conv_bn_leaky.2} parent=5 // pred_fallthru
      _
    %p154 = scmp.lt.s32.totalorder %s11, 4
    // Predicated region
    $region17: #{conv_bn_leaky.2} parent=5 // pred_check
      %p155 = pneg %p154
    $region18: #{conv_bn_leaky.2} parent=5 // pred_check_branch
      %157 = sbr.rel (%p155) target = $region20
    $region19: #{conv_bn_leaky.2} parent=5 // pred_region
      // Predicated region
      $region21: #{conv_bn_leaky.2} parent=19 // pred_check
        %p158 = pneg %p31
      $region22: #{conv_bn_leaky.2} parent=19 // pred_check_branch
        %160 = sbr.rel (%p158) target = $region24
      $region23: #{conv_bn_leaky.2} parent=19 // pred_region
        %s161 = smul.u32 16, %s11
        %p162 = scmp.lt.s32.totalorder %s161, 63
        %s163 = scalar_select %p162, %s161, 63
        %s164 = smul.addr %s163, 4
        %s165 = scalar_lea.vmem %s0, %s164
        %s166 = smul.u32 16, %s11
      $region24: #{conv_bn_leaky.2} parent=19 // pred_fallthru
        _
    $region20: #{conv_bn_leaky.2} parent=5 // pred_fallthru
      _
    %p167 = scmp.le.s32.totalorder 1, %s11
    %p168 = scmp.lt.s32.totalorder %s11, 5
    %p169 = pnand %p167, %p168
    %p170 = pneg %p169
    // Predicated region
    $region25: #{conv_bn_leaky.2} parent=5 // pred_check
      _
    $region26: #{conv_bn_leaky.2} parent=5 // pred_check_branch
      %172 = sbr.rel (%p169) target = $region28
    $region27: #{conv_bn_leaky.2} parent=5 // pred_region
      %s173 = ssub.s32 %s11, 1
      %s174 = smul.u32 16, %s16
      %p175 = scmp.lt.s32.totalorder %s174, 63
      %s176 = scalar_select %p175, %s174, 63
      %s177 = smul.addr %s176, 4
      %s178 = scalar_lea.vmem %s0, %s177
      %p179 = pneg %p37
      %p180 = pneg %p34
      %p181 = pneg %p58
      %p182 = pneg %p55
      %p183 = pneg %p84
      %p184 = pneg %p81
      %s185 = smul.u32 16, %s16
      %p186 = scmp.lt.s32.totalorder %s185, 63
      %s187 = scalar_select %p186, %s185, 63
      %s188 = smul.addr %s187, 8
      %s189 = scalar_lea.vmem %s2, %s188
      %p190 = pneg %p110
      %p191 = pneg %p107
      %p192 = scmp.lt.s32.totalorder %s16, 3
      %s193 = scalar_select %p192, %s16, 3
      %s194 = smul.addr %s193, 8
      %s195 = scalar_lea.vmem %s3, %s194
      %p196 = pneg %p136
      %p197 = pneg %p133
      %p198 = scmp.lt.s32.totalorder %s16, 3
      %s199 = scalar_select %p198, %s16, 3
      %s200 = smul.addr %s199, 8
      %s201 = scalar_lea.vmem %s4, %s200
      %s202 = smul.u32 16, %s16
      %p203 = scmp.lt.s32.totalorder %s202, 63
      %s204 = scalar_select %p203, %s202, 63
      %s205 = smul.addr %s204, 4
      %s206 = scalar_lea.vmem %s0, %s205
      %s207 = smul.u32 16, %s16
      %s208 = smul.u32 16, %s16
      %p209 = scmp.lt.s32.totalorder %s208, 63
      %s210 = scalar_select %p209, %s208, 63
      %s211 = smul.addr %s210, 8
      %s212 = scalar_lea.vmem %s2, %s211
      %s213 = smul.u32 16, %s16
      %p214 = scmp.lt.s32.totalorder %s16, 3
      %s215 = scalar_select %p214, %s16, 3
      %s216 = smul.addr %s215, 8
      %s217 = scalar_lea.vmem %s3, %s216
      %p218 = scmp.lt.s32.totalorder %s16, 3
      %s219 = scalar_select %p218, %s16, 3
      %s220 = smul.addr %s219, 8
      %s221 = scalar_lea.vmem %s4, %s220
      %v223 = vld [vmem:[%s206] sm:$0xf]
      %v224 = vld [vmem:[%s206 + $0x4] sm:$0xf]
      %v225 = vld [vmem:[%s206 + $0x8] sm:$0xf]
      %v226 = vld [vmem:[%s206 + $0xc] sm:$0xf]
      %v227 = vld [vmem:[%s206 + $0x10] sm:$0xf]
      %v228 = vld [vmem:[%s206 + $0x14] sm:$0xf]
      %v229 = vld [vmem:[%s206 + $0x18] sm:$0xf]
      %v230 = vld [vmem:[%s206 + $0x1c] sm:$0xf]
      %v231 = vld [vmem:[%s206 + $0x20] sm:$0xf]
      %v232 = vld [vmem:[%s206 + $0x24] sm:$0xf]
      %v233 = vld [vmem:[%s206 + $0x28] sm:$0xf]
      %v234 = vld [vmem:[%s206 + $0x2c] sm:$0xf]
      %v235 = vld [vmem:[%s206 + $0x30] sm:$0xf]
      %v236 = vld [vmem:[%s206 + $0x34] sm:$0xf]
      %v237 = vld [vmem:[%s206 + $0x38] sm:$0xf]
      %v238 = vld [vmem:[%s206 + $0x3c] sm:$0xf]
      %v239 = vld [vmem:[%s1] sm:$0xf]
      %v240 = vld [vmem:[%s1 + $0x4] sm:$0xf]
      %v241 = vld [vmem:[%s1 + $0x8] sm:$0xf]
      %v242 = vld [vmem:[%s1 + $0xc] sm:$0xf]
      %v243 = vld [vmem:[%s1 + $0x10] sm:$0xf]
      %v244 = vld [vmem:[%s1 + $0x14] sm:$0xf]
      %v245 = vld [vmem:[%s1 + $0x18] sm:$0xf]
      %v246 = vld [vmem:[%s1 + $0x1c] sm:$0xf]
      %v247 = vld [vmem:[%s1 + $0x20] sm:$0xf]
      %v248 = vld [vmem:[%s1 + $0x24] sm:$0xf]
      %v249 = vld [vmem:[%s1 + $0x28] sm:$0xf]
      %v250 = vld [vmem:[%s1 + $0x2c] sm:$0xf]
      %v251 = vld [vmem:[%s1 + $0x30] sm:$0xf]
      %v252 = vld [vmem:[%s1 + $0x34] sm:$0xf]
      %v253 = vld [vmem:[%s1 + $0x38] sm:$0xf]
      %v254 = vld [vmem:[%s1 + $0x3c] sm:$0xf]
      %v271 = vunpack.c.l.b16 %v223
      %v272 = vunpack.c.l.b16 %v224
      %v273 = vunpack.c.l.b16 %v225
      %v274 = vunpack.c.l.b16 %v226
      %v275 = vunpack.c.l.b16 %v227
      %v276 = vunpack.c.l.b16 %v228
      %v277 = vunpack.c.l.b16 %v229
      %v278 = vunpack.c.l.b16 %v230
      %v279 = vunpack.c.l.b16 %v231
      %v280 = vunpack.c.l.b16 %v232
      %v281 = vunpack.c.l.b16 %v233
      %v282 = vunpack.c.l.b16 %v234
      %v283 = vunpack.c.l.b16 %v235
      %v284 = vunpack.c.l.b16 %v236
      %v285 = vunpack.c.l.b16 %v237
      %v286 = vunpack.c.l.b16 %v238
      %v287 = vpack.c.b16 %v272, %v271
      %v288 = vpack.c.b16 %v274, %v273
      %v289 = vpack.c.b16 %v276, %v275
      %v290 = vpack.c.b16 %v278, %v277
      %v291 = vpack.c.b16 %v280, %v279
      %v292 = vpack.c.b16 %v282, %v281
      %v293 = vpack.c.b16 %v284, %v283
      %v294 = vpack.c.b16 %v286, %v285
      %v319 = vunpack.c.l.b16 %v239
      %v320 = vunpack.c.l.b16 %v240
      %v321 = vunpack.c.l.b16 %v241
      %v322 = vunpack.c.l.b16 %v242
      %v323 = vunpack.c.l.b16 %v243
      %v324 = vunpack.c.l.b16 %v244
      %v325 = vunpack.c.l.b16 %v245
      %v326 = vunpack.c.l.b16 %v246
      %v327 = vunpack.c.l.b16 %v247
      %v328 = vunpack.c.l.b16 %v248
      %v329 = vunpack.c.l.b16 %v249
      %v330 = vunpack.c.l.b16 %v250
      %v331 = vunpack.c.l.b16 %v251
      %v332 = vunpack.c.l.b16 %v252
      %v333 = vunpack.c.l.b16 %v253
      %v334 = vunpack.c.l.b16 %v254
      %v335 = vpack.c.b16 %v320, %v319
      %v336 = vpack.c.b16 %v322, %v321
      %v337 = vpack.c.b16 %v324, %v323
      %v338 = vpack.c.b16 %v326, %v325
      %v339 = vpack.c.b16 %v328, %v327
      %v340 = vpack.c.b16 %v330, %v329
      %v341 = vpack.c.b16 %v332, %v331
      %v342 = vpack.c.b16 %v334, %v333
      %351 = vmatprep.subr.bf16.mxu0 0
      %352 = vmatpush1.bf16.msra.mxu0 %v335
      %353 = vmatprep.subr.bf16.mxu0 0
      %354 = vmatpush1.bf16.msra.mxu0 %v336
      %355 = vmatprep.subr.bf16.mxu0 0
      %356 = vmatpush1.bf16.msra.mxu0 %v337
      %357 = vmatprep.subr.bf16.mxu0 0
      %358 = vmatpush1.bf16.msra.mxu0 %v338
      %359 = vmatprep.subr.bf16.mxu0 0
      %360 = vmatpush1.bf16.msra.mxu0 %v339
      %361 = vmatprep.subr.bf16.mxu0 0
      %362 = vmatpush1.bf16.msra.mxu0 %v340
      %363 = vmatprep.subr.bf16.mxu0 0
      %364 = vmatpush1.bf16.msra.mxu0 %v341
      %365 = vmatprep.subr.bf16.mxu0 0
      %366 = vmatpush1.bf16.msra.mxu0 %v342
      %367 = vmatprep.subr.bf16.mxu0 0
      %368 = vmatpush1.bf16.msra.mxu0 0
      %369 = vmatprep.subr.bf16.mxu0 0
      %370 = vmatpush1.bf16.msra.mxu0 0
      %371 = vmatprep.subr.bf16.mxu0 0
      %372 = vmatpush1.bf16.msra.mxu0 0
      %373 = vmatprep.subr.bf16.mxu0 0
      %374 = vmatpush1.bf16.msra.mxu0 0
      %375 = vmatprep.subr.bf16.mxu0 0
      %376 = vmatpush1.bf16.msra.mxu0 0
      %377 = vmatprep.subr.bf16.mxu0 0
      %378 = vmatpush1.bf16.msra.mxu0 0
      %379 = vmatprep.subr.bf16.mxu0 0
      %380 = vmatpush1.bf16.msra.mxu0 0
      %381 = vmatprep.subr.bf16.mxu0 0
      %382 = vmatpush1.bf16.msra.mxu0 0
      %383 = vmatprep.mubr.bf16.mxu0 0
      %384 = vmatmul.mubr.bf16.gmra.mrb[0].mxu0 %v287
      %v385 = vpop.f32.mrb[0].mxu0
      %v386 = vadd.f32 0.0, %v385
      %v387 = vpop.f32.mrb[0].mxu0
      %v388 = vpop.f32.mrb[0].mxu0
      %v389 = vadd.f32 0.0, %v388
      %v390 = vpop.f32.mrb[0].mxu0
      %391 = vmatprep.mubr.bf16.mxu0 0
      %392 = vmatmul.mubr.bf16.gmra.mrb[0].mxu0 %v288
      %v393 = vpop.f32.mrb[0].mxu0
      %v394 = vadd.f32 0.0, %v393
      %v395 = vpop.f32.mrb[0].mxu0
      %v396 = vpop.f32.mrb[0].mxu0
      %v397 = vadd.f32 0.0, %v396
      %v398 = vpop.f32.mrb[0].mxu0
      %399 = vmatprep.mubr.bf16.mxu0 0
      %400 = vmatmul.mubr.bf16.gmra.mrb[0].mxu0 %v289
      %v401 = vpop.f32.mrb[0].mxu0
      %v402 = vadd.f32 0.0, %v401
      %v403 = vpop.f32.mrb[0].mxu0
      %v404 = vpop.f32.mrb[0].mxu0
      %v405 = vadd.f32 0.0, %v404
      %v406 = vpop.f32.mrb[0].mxu0
      %407 = vmatprep.mubr.bf16.mxu0 0
      %408 = vmatmul.mubr.bf16.gmra.mrb[0].mxu0 %v290
      %v409 = vpop.f32.mrb[0].mxu0
      %v410 = vadd.f32 0.0, %v409
      %v411 = vpop.f32.mrb[0].mxu0
      %v412 = vpop.f32.mrb[0].mxu0
      %v413 = vadd.f32 0.0, %v412
      %v414 = vpop.f32.mrb[0].mxu0
      %415 = vmatprep.mubr.bf16.mxu0 0
      %416 = vmatmul.mubr.bf16.gmra.mrb[0].mxu0 %v291
      %v417 = vpop.f32.mrb[0].mxu0
      %v418 = vadd.f32 0.0, %v417
      %v419 = vpop.f32.mrb[0].mxu0
      %v420 = vpop.f32.mrb[0].mxu0
      %v421 = vadd.f32 0.0, %v420
      %v422 = vpop.f32.mrb[0].mxu0
      %423 = vmatprep.mubr.bf16.mxu0 0
      %424 = vmatmul.mubr.bf16.gmra.mrb[0].mxu0 %v292
      %v425 = vpop.f32.mrb[0].mxu0
      %v426 = vadd.f32 0.0, %v425
      %v427 = vpop.f32.mrb[0].mxu0
      %v428 = vpop.f32.mrb[0].mxu0
      %v429 = vadd.f32 0.0, %v428
      %v430 = vpop.f32.mrb[0].mxu0
      %431 = vmatprep.mubr.bf16.mxu0 0
      %432 = vmatmul.mubr.bf16.gmra.mrb[0].mxu0 %v293
      %v433 = vpop.f32.mrb[0].mxu0
      %v434 = vadd.f32 0.0, %v433
      %v435 = vpop.f32.mrb[0].mxu0
      %v436 = vpop.f32.mrb[0].mxu0
      %v437 = vadd.f32 0.0, %v436
      %v438 = vpop.f32.mrb[0].mxu0
      %439 = vmatprep.mubr.bf16.mxu0 0
      %440 = vmatmul.mubr.bf16.gmra.mrb[0].mxu0 %v294
      %v441 = vpop.f32.mrb[0].mxu0
      %v442 = vadd.f32 0.0, %v441
      %v443 = vpop.f32.mrb[0].mxu0
      %v444 = vpop.f32.mrb[0].mxu0
      %v445 = vadd.f32 0.0, %v444
      %v446 = vpop.f32.mrb[0].mxu0
      %447 = vdwg.mxu0
      %448 = vst [vmem:[%s212] sm:$0xff] %v386
      %449 = vst [vmem:[%s212 + $0x8] sm:$0xff] %v389
      %450 = vst [vmem:[%s212 + $0x10] sm:$0xff] %v394
      %451 = vst [vmem:[%s212 + $0x18] sm:$0xff] %v397
      %452 = vst [vmem:[%s212 + $0x20] sm:$0xff] %v402
      %453 = vst [vmem:[%s212 + $0x28] sm:$0xff] %v405
      %454 = vst [vmem:[%s212 + $0x30] sm:$0xff] %v410
      %455 = vst [vmem:[%s212 + $0x38] sm:$0xff] %v413
      %456 = vst [vmem:[%s212 + $0x40] sm:$0xff] %v418
      %457 = vst [vmem:[%s212 + $0x48] sm:$0xff] %v421
      %458 = vst [vmem:[%s212 + $0x50] sm:$0xff] %v426
      %459 = vst [vmem:[%s212 + $0x58] sm:$0xff] %v429
      %460 = vst [vmem:[%s212 + $0x60] sm:$0xff] %v434
      %461 = vst [vmem:[%s212 + $0x68] sm:$0xff] %v437
      %462 = vst [vmem:[%s212 + $0x70] sm:$0xff] %v442
      %463 = vst [vmem:[%s212 + $0x78] sm:$0xff] %v445
      %v464 = vadd.f32 %v386, %v389
      %v465 = vadd.f32 %v464, %v394
      %v466 = vadd.f32 %v465, %v397
      %v467 = vadd.f32 %v466, %v402
      %v468 = vadd.f32 %v467, %v405
      %v469 = vadd.f32 %v468, %v410
      %v470 = vadd.f32 %v469, %v413
      %v471 = vadd.f32 %v470, %v418
      %v472 = vadd.f32 %v471, %v421
      %v473 = vadd.f32 %v472, %v426
      %v474 = vadd.f32 %v473, %v429
      %v475 = vadd.f32 %v474, %v434
      %v476 = vadd.f32 %v475, %v437
      %v477 = vadd.f32 %v476, %v442
      %v478 = vadd.f32 %v477, %v445
      %v479 = vrot.slane %v478, 4
      %v480 = vadd.f32 %v478, %v479
      %v481 = vrot.slane %v480, 2
      %v482 = vadd.f32 %v480, %v481
      %v483 = vrot.slane %v482, 1
      %v484 = vadd.f32 %v482, %v483
      %v485 = vmul.f32 %v386, %v386
      %v486 = vmul.f32 %v389, %v389
      %v487 = vmul.f32 %v394, %v394
      %v488 = vmul.f32 %v397, %v397
      %v489 = vmul.f32 %v402, %v402
      %v490 = vmul.f32 %v405, %v405
      %v491 = vmul.f32 %v410, %v410
      %v492 = vmul.f32 %v413, %v413
      %v493 = vmul.f32 %v418, %v418
      %v494 = vmul.f32 %v421, %v421
      %v495 = vmul.f32 %v426, %v426
      %v496 = vmul.f32 %v429, %v429
      %v497 = vmul.f32 %v434, %v434
      %v498 = vmul.f32 %v437, %v437
      %v499 = vmul.f32 %v442, %v442
      %v500 = vmul.f32 %v445, %v445
      %v501 = vadd.f32 %v485, %v486
      %v502 = vadd.f32 %v501, %v487
      %v503 = vadd.f32 %v502, %v488
      %v504 = vadd.f32 %v503, %v489
      %v505 = vadd.f32 %v504, %v490
      %v506 = vadd.f32 %v505, %v491
      %v507 = vadd.f32 %v506, %v492
      %v508 = vadd.f32 %v507, %v493
      %v509 = vadd.f32 %v508, %v494
      %v510 = vadd.f32 %v509, %v495
      %v511 = vadd.f32 %v510, %v496
      %v512 = vadd.f32 %v511, %v497
      %v513 = vadd.f32 %v512, %v498
      %v514 = vadd.f32 %v513, %v499
      %v515 = vadd.f32 %v514, %v500
      %v516 = vrot.slane %v515, 4
      %v517 = vadd.f32 %v515, %v516
      %v518 = vrot.slane %v517, 2
      %v519 = vadd.f32 %v517, %v518
      %v520 = vrot.slane %v519, 1
      %v521 = vadd.f32 %v519, %v520
      %522 = vst [vmem:[%s217] sm:$0xff] %v484
      %523 = vst [vmem:[%s221] sm:$0xff] %v521
      %s524 = smul.u32 16, %s16
      %p525 = scmp.lt.s32.totalorder %s524, 63
      %s526 = scalar_select %p525, %s524, 63
      %s527 = smul.addr %s526, 8
      %s528 = scalar_lea.vmem %s2, %s527
      %p529 = scmp.lt.s32.totalorder %s16, 3
      %s530 = scalar_select %p529, %s16, 3
      %s531 = smul.addr %s530, 8
      %s532 = scalar_lea.vmem %s3, %s531
      %p533 = scmp.lt.s32.totalorder %s16, 3
      %s534 = scalar_select %p533, %s16, 3
      %s535 = smul.addr %s534, 8
      %s536 = scalar_lea.vmem %s4, %s535
      // Predicated region
      $region29: #{conv_bn_leaky.2} parent=27 // pred_check
        %p537 = pneg %p81
      $region30: #{conv_bn_leaky.2} parent=27 // pred_check_branch
        %539 = sbr.rel (%p537) target = $region32
      $region31: #{conv_bn_leaky.2} parent=27 // pred_region
        %s540 = smul.u32 16, %s16
      $region32: #{conv_bn_leaky.2} parent=27 // pred_fallthru
        _
      // Predicated region
      $region33: #{conv_bn_leaky.2} parent=27 // pred_check
        %p541 = pneg %p107
      $region34: #{conv_bn_leaky.2} parent=27 // pred_check_branch
        %543 = sbr.rel (%p541) target = $region36
      $region35: #{conv_bn_leaky.2} parent=27 // pred_region
        _
      $region36: #{conv_bn_leaky.2} parent=27 // pred_fallthru
        _
      // Predicated region
      $region37: #{conv_bn_leaky.2} parent=27 // pred_check
        %p544 = pneg %p133
      $region38: #{conv_bn_leaky.2} parent=27 // pred_check_branch
        %546 = sbr.rel (%p544) target = $region40
      $region39: #{conv_bn_leaky.2} parent=27 // pred_region
        _
      $region40: #{conv_bn_leaky.2} parent=27 // pred_fallthru
        _
    $region28: #{conv_bn_leaky.2} parent=5 // pred_fallthru
      _
    %p547 = scmp.le.s32.totalorder 2, %s11
    // Predicated region
    $region41: #{conv_bn_leaky.2} parent=5 // pred_check
      %p548 = pneg %p547
    $region42: #{conv_bn_leaky.2} parent=5 // pred_check_branch
      %550 = sbr.rel (%p548) target = $region44
    $region43: #{conv_bn_leaky.2} parent=5 // pred_region
      %s551 = ssub.s32 %s11, 2
      // Predicated region
      $region45: #{conv_bn_leaky.2} parent=43 // pred_check
        %p552 = pneg %p87
      $region46: #{conv_bn_leaky.2} parent=43 // pred_check_branch
        %554 = sbr.rel (%p552) target = $region48
      $region47: #{conv_bn_leaky.2} parent=43 // pred_region
        %s555 = smul.u32 16, %s17
        %p556 = scmp.lt.s32.totalorder %s555, 63
        %s557 = scalar_select %p556, %s555, 63
        %s558 = smul.addr %s557, 8
        %s559 = scalar_lea.vmem %s2, %s558
      $region48: #{conv_bn_leaky.2} parent=43 // pred_fallthru
        _
      // Predicated region
      $region49: #{conv_bn_leaky.2} parent=43 // pred_check
        %p560 = pneg %p113
      $region50: #{conv_bn_leaky.2} parent=43 // pred_check_branch
        %562 = sbr.rel (%p560) target = $region52
      $region51: #{conv_bn_leaky.2} parent=43 // pred_region
        %p563 = scmp.lt.s32.totalorder %s17, 3
        %s564 = scalar_select %p563, %s17, 3
        %s565 = smul.addr %s564, 8
        %s566 = scalar_lea.vmem %s3, %s565
      $region52: #{conv_bn_leaky.2} parent=43 // pred_fallthru
        _
      // Predicated region
      $region53: #{conv_bn_leaky.2} parent=43 // pred_check
        %p567 = pneg %p139
      $region54: #{conv_bn_leaky.2} parent=43 // pred_check_branch
        %569 = sbr.rel (%p567) target = $region56
      $region55: #{conv_bn_leaky.2} parent=43 // pred_region
        %p570 = scmp.lt.s32.totalorder %s17, 3
        %s571 = scalar_select %p570, %s17, 3
        %s572 = smul.addr %s571, 8
        %s573 = scalar_lea.vmem %s4, %s572
      $region56: #{conv_bn_leaky.2} parent=43 // pred_fallthru
        _
    $region44: #{conv_bn_leaky.2} parent=5 // pred_fallthru
      _
  $region6: #{conv_bn_leaky.2} parent=0 // loop_footer
    %s15 = sadd.s32 1, %s11
  $region7: #{conv_bn_leaky.2} parent=0 // loop_footer_branch
    %10 = sbr.rel target = $region3
  $region8: #{conv_bn_leaky.2} parent=0 // loop_exit
    _

// kernel: conv_bn_leaky.3
$region0: #{conv_bn_leaky.3}
  #allocation0 [shape = 'u32[]', space=smem, size = 0x4, offset = 0x4, fixed_abs, tag = 'smem constant byte address 0x4 - core index']
  #allocation1 [shape = 'u32[144,128]{1,0:T(1,128)}', space=vmem, size = 0x12000, scoped, tag = 'internal scratch']
  %s0 = inlined_call_operand.vmem [shape: f32[512,128], index: 0, kind: input, shape index: {}]
  %s1 = inlined_call_operand.vmem [shape: f32[1,128], index: 1, kind: input, shape index: {}]
  %s2 = inlined_call_operand.vmem [shape: f32[1,128], index: 2, kind: input, shape index: {}]
  %s3 = inlined_call_operand.vmem [shape: f32[512,128], index: 3, kind: output, shape index: {}]
  %s4 = sld [smem:[#allocation0]]
  $region45: #{conv_bn_leaky.3} parent=0
    _
  %s6 = ssub.s32 1, %s4
  %s7 = scalar_select 0, %s6, %s4
  loop: start=0, step=1, limit=6
  $region2: #{conv_bn_leaky.3} parent=0 // loop_pre_header
    _
  $region3: #{conv_bn_leaky.3} parent=0 // loop_header
    %s9 = sphi 0, %s13
    %p10 = scmp.ge.s32.totalorder %s9, 6
    %s19 = sphi 0, %s21
    %s22 = sphi 0, %s19
    %s23 = sphi 0, %s22
    %s39 = sphi 0, %s23
    %s43 = sphi 0, %s43
    %s45 = sphi 0, %s43
    %s46 = sphi 0, %s45
    %s60 = sphi 0, %s46
    %s64 = sphi 0, %s64
    %s66 = sphi 0, %s64
    %s67 = sphi 0, %s66
    %s81 = sphi 0, %s67
    %s87 = sphi 0, %s89
    %s90 = sphi 0, %s87
    %s91 = sphi 0, %s90
    %s107 = sphi 0, %s91
  $region4: #{conv_bn_leaky.3} parent=0 // loop_header_branch
    %12 = sbr.rel (%p10) target = $region8
  $region5: #{conv_bn_leaky.3} parent=0 // loop_body
    %s14 = ssub.s32 %s9, 1
    %s15 = ssub.s32 %s9, 2
    %s16 = sadd.s32 %s9, 1
    %s17 = ssub.s32 %s9, %s16
    %p18 = scmp.eq.s32.totalorder %s17, 0
    %s20 = sadd.s32 %s19, 1
    %s21 = scalar_select %p18, %s19, %s20
    %p24 = pneg %p18
    %p25 = scmp.eq.s32.totalorder %s9, 3
    %p26 = por %p24, %p25
    %p27 = scmp.ne.s32.totalorder %s19, %s22
    %p28 = scmp.eq.s32.totalorder %s9, 0
    %p29 = por %p27, %p28
    %p30 = scmp.ne.s32.totalorder %s19, %s22
    %p31 = scmp.eq.s32.totalorder %s14, 3
    %p32 = por %p30, %p31
    %p33 = scmp.ne.s32.totalorder %s22, %s23
    %p34 = scmp.eq.s32.totalorder %s14, 0
    %p35 = por %p33, %p34
    %p36 = scmp.ne.s32.totalorder %s22, %s23
    %p37 = scmp.eq.s32.totalorder %s15, 3
    %p38 = por %p36, %p37
    %p40 = scmp.ne.s32.totalorder %s23, %s39
    %p41 = scmp.eq.s32.totalorder %s15, 0
    %p42 = por %p40, %p41
    %s44 = sadd.s32 %s43, 1
    %p47 = scmp.eq.s32.totalorder %s9, 3
    %p48 = scmp.ne.s32.totalorder %s43, %s45
    %p49 = scmp.eq.s32.totalorder %s9, 0
    %p50 = por %p48, %p49
    %p51 = scmp.ne.s32.totalorder %s43, %s45
    %p52 = scmp.eq.s32.totalorder %s14, 3
    %p53 = por %p51, %p52
    %p54 = scmp.ne.s32.totalorder %s45, %s46
    %p55 = scmp.eq.s32.totalorder %s14, 0
    %p56 = por %p54, %p55
    %p57 = scmp.ne.s32.totalorder %s45, %s46
    %p58 = scmp.eq.s32.totalorder %s15, 3
    %p59 = por %p57, %p58
    %p61 = scmp.ne.s32.totalorder %s46, %s60
    %p62 = scmp.eq.s32.totalorder %s15, 0
    %p63 = por %p61, %p62
    %s65 = sadd.s32 %s64, 1
    %p68 = scmp.eq.s32.totalorder %s9, 3
    %p69 = scmp.ne.s32.totalorder %s64, %s66
    %p70 = scmp.eq.s32.totalorder %s9, 0
    %p71 = por %p69, %p70
    %p72 = scmp.ne.s32.totalorder %s64, %s66
    %p73 = scmp.eq.s32.totalorder %s14, 3
    %p74 = por %p72, %p73
    %p75 = scmp.ne.s32.totalorder %s66, %s67
    %p76 = scmp.eq.s32.totalorder %s14, 0
    %p77 = por %p75, %p76
    %p78 = scmp.ne.s32.totalorder %s66, %s67
    %p79 = scmp.eq.s32.totalorder %s15, 3
    %p80 = por %p78, %p79
    %p82 = scmp.ne.s32.totalorder %s67, %s81
    %p83 = scmp.eq.s32.totalorder %s15, 0
    %p84 = por %p82, %p83
    %s85 = ssub.s32 %s9, %s16
    %p86 = scmp.eq.s32.totalorder %s85, 0
    %s88 = sadd.s32 %s87, 1
    %s89 = scalar_select %p86, %s87, %s88
    %p92 = pneg %p86
    %p93 = scmp.eq.s32.totalorder %s9, 3
    %p94 = por %p92, %p93
    %p95 = scmp.ne.s32.totalorder %s87, %s90
    %p96 = scmp.eq.s32.totalorder %s9, 0
    %p97 = por %p95, %p96
    %p98 = scmp.ne.s32.totalorder %s87, %s90
    %p99 = scmp.eq.s32.totalorder %s14, 3
    %p100 = por %p98, %p99
    %p101 = scmp.ne.s32.totalorder %s90, %s91
    %p102 = scmp.eq.s32.totalorder %s14, 0
    %p103 = por %p101, %p102
    %p104 = scmp.ne.s32.totalorder %s90, %s91
    %p105 = scmp.eq.s32.totalorder %s15, 3
    %p106 = por %p104, %p105
    %p108 = scmp.ne.s32.totalorder %s91, %s107
    %p109 = scmp.eq.s32.totalorder %s15, 0
    %p110 = por %p108, %p109
    %p111 = scmp.le.s32.totalorder 1, %s9
    %p112 = scmp.lt.s32.totalorder %s9, 5
    %p113 = pnand %p111, %p112
    %p114 = pneg %p113
    // Predicated region
    $region9: #{conv_bn_leaky.3} parent=5 // pred_check
      _
    $region10: #{conv_bn_leaky.3} parent=5 // pred_check_branch
      %116 = sbr.rel (%p113) target = $region12
    $region11: #{conv_bn_leaky.3} parent=5 // pred_region
      %s117 = ssub.s32 %s9, 1
      // Predicated region
      $region13: #{conv_bn_leaky.3} parent=11 // pred_check
        %p118 = pneg %p56
      $region14: #{conv_bn_leaky.3} parent=11 // pred_check_branch
        %120 = sbr.rel (%p118) target = $region16
      $region15: #{conv_bn_leaky.3} parent=11 // pred_region
        _
      $region16: #{conv_bn_leaky.3} parent=11 // pred_fallthru
        _
      // Predicated region
      $region17: #{conv_bn_leaky.3} parent=11 // pred_check
        %p121 = pneg %p77
      $region18: #{conv_bn_leaky.3} parent=11 // pred_check_branch
        %123 = sbr.rel (%p121) target = $region20
      $region19: #{conv_bn_leaky.3} parent=11 // pred_region
        _
      $region20: #{conv_bn_leaky.3} parent=11 // pred_fallthru
        _
    $region12: #{conv_bn_leaky.3} parent=5 // pred_fallthru
      _
    %p124 = scmp.lt.s32.totalorder %s9, 4
    // Predicated region
    $region21: #{conv_bn_leaky.3} parent=5 // pred_check
      %p125 = pneg %p124
    $region22: #{conv_bn_leaky.3} parent=5 // pred_check_branch
      %127 = sbr.rel (%p125) target = $region24
    $region23: #{conv_bn_leaky.3} parent=5 // pred_region
      // Predicated region
      $region25: #{conv_bn_leaky.3} parent=23 // pred_check
        %p128 = pneg %p29
      $region26: #{conv_bn_leaky.3} parent=23 // pred_check_branch
        %130 = sbr.rel (%p128) target = $region28
      $region27: #{conv_bn_leaky.3} parent=23 // pred_region
        %s131 = smul.u32 16, %s9
        %p132 = scmp.lt.s32.totalorder %s131, 63
        %s133 = scalar_select %p132, %s131, 63
        %s134 = smul.addr %s133, 8
        %s135 = scalar_lea.vmem %s0, %s134
        %s136 = smul.u32 16, %s9
      $region28: #{conv_bn_leaky.3} parent=23 // pred_fallthru
        _
    $region24: #{conv_bn_leaky.3} parent=5 // pred_fallthru
      _
    %p137 = scmp.le.s32.totalorder 1, %s9
    %p138 = scmp.lt.s32.totalorder %s9, 5
    %p139 = pnand %p137, %p138
    %p140 = pneg %p139
    // Predicated region
    $region29: #{conv_bn_leaky.3} parent=5 // pred_check
      _
    $region30: #{conv_bn_leaky.3} parent=5 // pred_check_branch
      %142 = sbr.rel (%p139) target = $region32
    $region31: #{conv_bn_leaky.3} parent=5 // pred_region
      %s143 = ssub.s32 %s9, 1
      %s144 = smul.u32 16, %s14
      %p145 = scmp.lt.s32.totalorder %s144, 63
      %s146 = scalar_select %p145, %s144, 63
      %s147 = smul.addr %s146, 8
      %s148 = scalar_lea.vmem %s0, %s147
      %p149 = pneg %p35
      %p150 = pneg %p32
      %p151 = pneg %p56
      %p152 = pneg %p53
      %p153 = pneg %p77
      %p154 = pneg %p74
      %p155 = pneg %p103
      %p156 = pneg %p100
      %s157 = smul.u32 16, %s14
      %p158 = scmp.lt.s32.totalorder %s157, 63
      %s159 = scalar_select %p158, %s157, 63
      %s160 = smul.addr %s159, 8
      %s161 = scalar_lea.vmem %s3, %s160
      %s162 = smul.u32 16, %s14
      %p163 = scmp.lt.s32.totalorder %s162, 63
      %s164 = scalar_select %p163, %s162, 63
      %s165 = smul.addr %s164, 8
      %s166 = scalar_lea.vmem %s0, %s165
      %s167 = smul.u32 16, %s14
      %s168 = smul.u32 16, %s14
      %p169 = scmp.lt.s32.totalorder %s168, 63
      %s170 = scalar_select %p169, %s168, 63
      %s171 = smul.addr %s170, 8
      %s172 = scalar_lea.vmem %s3, %s171
      %s173 = smul.u32 16, %s14
      %v174 = vld [vmem:[%s166] sm:$0xff]
      %v175 = vld [vmem:[%s166 + $0x8] sm:$0xff]
      %v176 = vld [vmem:[%s166 + $0x10] sm:$0xff]
      %v177 = vld [vmem:[%s166 + $0x18] sm:$0xff]
      %v178 = vld [vmem:[%s166 + $0x20] sm:$0xff]
      %v179 = vld [vmem:[%s166 + $0x28] sm:$0xff]
      %v180 = vld [vmem:[%s166 + $0x30] sm:$0xff]
      %v181 = vld [vmem:[%s166 + $0x38] sm:$0xff]
      %v182 = vld [vmem:[%s166 + $0x40] sm:$0xff]
      %v183 = vld [vmem:[%s166 + $0x48] sm:$0xff]
      %v184 = vld [vmem:[%s166 + $0x50] sm:$0xff]
      %v185 = vld [vmem:[%s166 + $0x58] sm:$0xff]
      %v186 = vld [vmem:[%s166 + $0x60] sm:$0xff]
      %v187 = vld [vmem:[%s166 + $0x68] sm:$0xff]
      %v188 = vld [vmem:[%s166 + $0x70] sm:$0xff]
      %v189 = vld [vmem:[%s166 + $0x78] sm:$0xff]
      %v190 = vld [vmem:[%s1] sm:$0x1]
      %v192 = vlaneseq
      %v193 = vshrl.u32 %v192, 7
      %v194 = vsub.s32 0, %v193
      %v195 = vrot.slane %v190, %v194
      %v197 = vmul.f32 %v174, %v195
      %v198 = vmul.f32 %v175, %v195
      %v199 = vmul.f32 %v176, %v195
      %v200 = vmul.f32 %v177, %v195
      %v201 = vmul.f32 %v178, %v195
      %v202 = vmul.f32 %v179, %v195
      %v203 = vmul.f32 %v180, %v195
      %v204 = vmul.f32 %v181, %v195
      %v205 = vmul.f32 %v182, %v195
      %v206 = vmul.f32 %v183, %v195
      %v207 = vmul.f32 %v184, %v195
      %v208 = vmul.f32 %v185, %v195
      %v209 = vmul.f32 %v186, %v195
      %v210 = vmul.f32 %v187, %v195
      %v211 = vmul.f32 %v188, %v195
      %v212 = vmul.f32 %v189, %v195
      %v213 = vld [vmem:[%s2] sm:$0x1]
      %v215 = vlaneseq
      %v216 = vshrl.u32 %v215, 7
      %v217 = vsub.s32 0, %v216
      %v218 = vrot.slane %v213, %v217
      %v220 = vadd.f32 %v197, %v218
      %v221 = vadd.f32 %v198, %v218
      %v222 = vadd.f32 %v199, %v218
      %v223 = vadd.f32 %v200, %v218
      %v224 = vadd.f32 %v201, %v218
      %v225 = vadd.f32 %v202, %v218
      %v226 = vadd.f32 %v203, %v218
      %v227 = vadd.f32 %v204, %v218
      %v228 = vadd.f32 %v205, %v218
      %v229 = vadd.f32 %v206, %v218
      %v230 = vadd.f32 %v207, %v218
      %v231 = vadd.f32 %v208, %v218
      %v232 = vadd.f32 %v209, %v218
      %v233 = vadd.f32 %v210, %v218
      %v234 = vadd.f32 %v211, %v218
      %v235 = vadd.f32 %v212, %v218
      %vm236 = vcmp.ge.f32.partialorder %v220, 0.0
      %vm237 = vcmp.ge.f32.partialorder %v221, 0.0
      %vm238 = vcmp.ge.f32.partialorder %v222, 0.0
      %vm239 = vcmp.ge.f32.partialorder %v223, 0.0
      %vm240 = vcmp.ge.f32.partialorder %v224, 0.0
      %vm241 = vcmp.ge.f32.partialorder %v225, 0.0
      %vm242 = vcmp.ge.f32.partialorder %v226, 0.0
      %vm243 = vcmp.ge.f32.partialorder %v227, 0.0
      %vm244 = vcmp.ge.f32.partialorder %v228, 0.0
      %vm245 = vcmp.ge.f32.partialorder %v229, 0.0
      %vm246 = vcmp.ge.f32.partialorder %v230, 0.0
      %vm247 = vcmp.ge.f32.partialorder %v231, 0.0
      %vm248 = vcmp.ge.f32.partialorder %v232, 0.0
      %vm249 = vcmp.ge.f32.partialorder %v233, 0.0
      %vm250 = vcmp.ge.f32.partialorder %v234, 0.0
      %vm251 = vcmp.ge.f32.partialorder %v235, 0.0
      %v252 = vmul.f32 %v220, 0.1
      %v253 = vmul.f32 %v221, 0.1
      %v254 = vmul.f32 %v222, 0.1
      %v255 = vmul.f32 %v223, 0.1
      %v256 = vmul.f32 %v224, 0.1
      %v257 = vmul.f32 %v225, 0.1
      %v258 = vmul.f32 %v226, 0.1
      %v259 = vmul.f32 %v227, 0.1
      %v260 = vmul.f32 %v228, 0.1
      %v261 = vmul.f32 %v229, 0.1
      %v262 = vmul.f32 %v230, 0.1
      %v263 = vmul.f32 %v231, 0.1
      %v264 = vmul.f32 %v232, 0.1
      %v265 = vmul.f32 %v233, 0.1
      %v266 = vmul.f32 %v234, 0.1
      %v267 = vmul.f32 %v235, 0.1
      %v268 = vsel %vm236, %v220, %v252
      %v269 = vsel %vm237, %v221, %v253
      %v270 = vsel %vm238, %v222, %v254
      %v271 = vsel %vm239, %v223, %v255
      %v272 = vsel %vm240, %v224, %v256
      %v273 = vsel %vm241, %v225, %v257
      %v274 = vsel %vm242, %v226, %v258
      %v275 = vsel %vm243, %v227, %v259
      %v276 = vsel %vm244, %v228, %v260
      %v277 = vsel %vm245, %v229, %v261
      %v278 = vsel %vm246, %v230, %v262
      %v279 = vsel %vm247, %v231, %v263
      %v280 = vsel %vm248, %v232, %v264
      %v281 = vsel %vm249, %v233, %v265
      %v282 = vsel %vm250, %v234, %v266
      %v283 = vsel %vm251, %v235, %v267
      %284 = vst [vmem:[%s172] sm:$0xff] %v268
      %285 = vst [vmem:[%s172 + $0x8] sm:$0xff] %v269
      %286 = vst [vmem:[%s172 + $0x10] sm:$0xff] %v270
      %287 = vst [vmem:[%s172 + $0x18] sm:$0xff] %v271
      %288 = vst [vmem:[%s172 + $0x20] sm:$0xff] %v272
      %289 = vst [vmem:[%s172 + $0x28] sm:$0xff] %v273
      %290 = vst [vmem:[%s172 + $0x30] sm:$0xff] %v274
      %291 = vst [vmem:[%s172 + $0x38] sm:$0xff] %v275
      %292 = vst [vmem:[%s172 + $0x40] sm:$0xff] %v276
      %293 = vst [vmem:[%s172 + $0x48] sm:$0xff] %v277
      %294 = vst [vmem:[%s172 + $0x50] sm:$0xff] %v278
      %295 = vst [vmem:[%s172 + $0x58] sm:$0xff] %v279
      %296 = vst [vmem:[%s172 + $0x60] sm:$0xff] %v280
      %297 = vst [vmem:[%s172 + $0x68] sm:$0xff] %v281
      %298 = vst [vmem:[%s172 + $0x70] sm:$0xff] %v282
      %299 = vst [vmem:[%s172 + $0x78] sm:$0xff] %v283
      %s300 = smul.u32 16, %s14
      %p301 = scmp.lt.s32.totalorder %s300, 63
      %s302 = scalar_select %p301, %s300, 63
      %s303 = smul.addr %s302, 8
      %s304 = scalar_lea.vmem %s3, %s303
      // Predicated region
      $region33: #{conv_bn_leaky.3} parent=31 // pred_check
        %p305 = pneg %p100
      $region34: #{conv_bn_leaky.3} parent=31 // pred_check_branch
        %307 = sbr.rel (%p305) target = $region36
      $region35: #{conv_bn_leaky.3} parent=31 // pred_region
        %s308 = smul.u32 16, %s14
      $region36: #{conv_bn_leaky.3} parent=31 // pred_fallthru
        _
    $region32: #{conv_bn_leaky.3} parent=5 // pred_fallthru
      _
    %p309 = scmp.le.s32.totalorder 2, %s9
    // Predicated region
    $region37: #{conv_bn_leaky.3} parent=5 // pred_check
      %p310 = pneg %p309
    $region38: #{conv_bn_leaky.3} parent=5 // pred_check_branch
      %312 = sbr.rel (%p310) target = $region40
    $region39: #{conv_bn_leaky.3} parent=5 // pred_region
      %s313 = ssub.s32 %s9, 2
      // Predicated region
      $region41: #{conv_bn_leaky.3} parent=39 // pred_check
        %p314 = pneg %p106
      $region42: #{conv_bn_leaky.3} parent=39 // pred_check_branch
        %316 = sbr.rel (%p314) target = $region44
      $region43: #{conv_bn_leaky.3} parent=39 // pred_region
        %s317 = smul.u32 16, %s15
        %p318 = scmp.lt.s32.totalorder %s317, 63
        %s319 = scalar_select %p318, %s317, 63
        %s320 = smul.addr %s319, 8
        %s321 = scalar_lea.vmem %s3, %s320
      $region44: #{conv_bn_leaky.3} parent=39 // pred_fallthru
        _
    $region40: #{conv_bn_leaky.3} parent=5 // pred_fallthru
      _
  $region6: #{conv_bn_leaky.3} parent=0 // loop_footer
    %s13 = sadd.s32 1, %s9
  $region7: #{conv_bn_leaky.3} parent=0 // loop_footer_branch
    %8 = sbr.rel target = $region3
  $region8: #{conv_bn_leaky.3} parent=0 // loop_exit
    _

</llo_original>
